<compile_context>
chip_gen: v6e
topology: v6e:2x2x1
jax: 0.10.0
libtpu: 0.0.40
codegen_flags: <defaults>
</compile_context>

<pallas_src>
import jax
import jax.numpy as jnp
from jax import lax
from jax.experimental import pallas as pl
from jax.experimental.pallas import tpu as pltpu


# --------------------------------------------------------------------------
# Kernel: one (batch_tile) x (one replicator block) grid step
# --------------------------------------------------------------------------
def replicator_fwd_kernel(step_ref, x_ref, w_seq_ref, w_emb_ref, w_proj_ref,
                          out_ref, x_scr):
    """
    step_ref:   (NB,)             f32 in SMEM (scalar prefetch) per-block step
    x_ref:      (btS, E)          f32  embedded tokens (pre-softmax)
    w_seq_ref:  (1, btS, btS)     f32  block-diag (masked) seq_weight, block k
    w_emb_ref:  (1, E, E)         bf16 embedding_weight of block k
    w_proj_ref: (V, E)            bf16 projection weight
    out_ref:    (btS, V)          f32  logits
    x_scr:      (btS, E)          f32  running activation (persists across k)
    """
    k = pl.program_id(1)
    nb = pl.num_programs(1)

    # ---- first block: softmax over the embedding axis ----------------------
    @pl.when(k == 0)
    def _init():
        x = x_ref[...]
        x = x - jnp.max(x, axis=-1, keepdims=True)
        ex = jnp.exp(x)
        inv = pl.reciprocal(jnp.sum(ex, axis=-1, keepdims=True), approx=True)
        x_scr[...] = ex * inv

    # ---- ReplicatorEmbeddingLayer k (one wide matmul each) -----------------
    x = x_scr[...]                                                # (btS, E)
    w_sbd = w_seq_ref[0]                                          # (btS, btS) f32
    w_e = w_emb_ref[0]                                            # (E, E) bf16
    step = step_ref[k]                                            # f32 scalar

    # x_seq_weight: block-diag seq weight -> one (btS,btS)@(btS,E) matmul.
    # f32 inputs on purpose (tiny / latency-bound; avoids bf16 drift in the
    # recurrence).
    xs = jnp.dot(w_sbd, x, preferred_element_type=jnp.float32)    # (btS, E)
    # fitnesses = xs @ emb_w^T  (single MXU matmul, M = btS)
    fit = lax.dot_general(xs.astype(jnp.bfloat16), w_e,
                          dimension_numbers=(((1,), (1,)), ((), ())),
                          preferred_element_type=jnp.float32)     # (btS, E)
    # avg_fitness: torch einsum('b e s, b e s -> b e') == sum over last axis
    avg = jnp.sum(x * fit, axis=-1, keepdims=True)                # (btS, 1)
    x_next = x + step * (x * (fit - avg))
    x_scr[...] = jnp.maximum(x_next, 0.0)                         # ReLU

    # ---- last block: projection to vocab logits (one wide matmul + store) --
    @pl.when(k == nb - 1)
    def _project():
        y = lax.dot_general(x_scr[...].astype(jnp.bfloat16), w_proj_ref[...],
                            dimension_numbers=(((1,), (1,)), ((), ())),
                            preferred_element_type=jnp.float32)   # (btS, V)
        out_ref[...] = y.astype(out_ref.dtype)


# --------------------------------------------------------------------------
# Wrapper
# --------------------------------------------------------------------------
def replicator_embedding_network_forward(tokens, emb_table, w_emb, w_seq,
                                          step_sizes, w_proj, *, mask=True,
                                          batch_tile=None):
    """tokens: (B, S) int32.  Returns logits (B, S, V) float32."""
    B, S = tokens.shape
    V, E = w_proj.shape
    NB = w_emb.shape[0]

    if batch_tile is None:
        # Fill the MXU M dimension: target bt*S >= 128 rows ...
        batch_tile = max(1, min(B, max(1, 128 // S)))
        while B % batch_tile:
            batch_tile -= 1
        # ... but keep >= 2 batch tiles so v7x's second TensorCore has work.
        if B // batch_tile < 2 and batch_tile % 2 == 0:
            batch_tile //= 2
    assert B % batch_tile == 0, (B, batch_tile)
    btS = batch_tile * S

    # Embedding lookup is a data-dependent gather: plain-JAX glue.
    x = jnp.take(emb_table, tokens, axis=0).astype(jnp.float32)   # (B, S, E)
    x2d = x.reshape(B * S, E)                                     # free reshape

    # Causal mask (as torch masked_fill) + block-diagonalize per batch tile:
    # w_seq_bd[k] = kron(I_bt, w_seq_masked[k])  -> (NB, btS, btS), f32.
    if mask:
        tri = jnp.triu(jnp.ones((S, S), dtype=bool), k=1)
        w_seq = jnp.where(tri[None, :, :], 0.0, w_seq)
    eye_bt = jnp.eye(batch_tile, dtype=jnp.float32)
    w_seq_bd = (eye_bt[None, :, None, :, None] *
                w_seq.astype(jnp.float32)[:, None, :, None, :]
                ).reshape(NB, btS, btS)

    # Big-matmul operands in bf16 (halves weight DMA; f32 accumulation).
    w_emb_b = w_emb.astype(jnp.bfloat16)
    w_proj_b = w_proj.astype(jnp.bfloat16)
    # TODO(synk): at real vocab sizes, tile w_proj over a V grid axis instead
    # of keeping the full (V, E) block resident (matters on v7x's 64 MiB VMEM).

    out2d = pl.pallas_call(
        replicator_fwd_kernel,
        out_shape=jax.ShapeDtypeStruct((B * S, V), jnp.float32),
        grid_spec=pltpu.PrefetchScalarGridSpec(
            num_scalar_prefetch=1,                        # step_sizes -> SMEM
            grid=(B // batch_tile, NB),
            in_specs=[
                pl.BlockSpec((btS, E), lambda b, k, ss: (b, 0)),
                pl.BlockSpec((1, btS, btS), lambda b, k, ss: (k, 0, 0)),
                pl.BlockSpec((1, E, E), lambda b, k, ss: (k, 0, 0)),
                pl.BlockSpec((V, E), lambda b, k, ss: (0, 0)),
            ],
            out_specs=pl.BlockSpec((btS, V), lambda b, k, ss: (b, 0)),
            scratch_shapes=[pltpu.VMEM((btS, E), jnp.float32)],
        ),
        compiler_params=pltpu.CompilerParams(
            dimension_semantics=("parallel", "arbitrary"),
            vmem_limit_bytes=32 * 1024 * 1024,
        ),
    )(step_sizes.astype(jnp.float32), x2d, w_seq_bd, w_emb_b, w_proj_b)

    return out2d.reshape(B, S, V)


# --------------------------------------------------------------------------
# Deterministic parameter initialization (mirrors the torch __init__ shapes)
# --------------------------------------------------------------------------
def init_params(key, blocks_num, seq_len, embedding_size, vocab_size,
                padding_idx):
    k_emb, k_we, k_ws, k_step, k_proj = jax.random.split(key, 5)

    # nn.Embedding: N(0, 1), padding_idx row zeroed
    emb_table = jax.random.normal(k_emb, (vocab_size, embedding_size),
                                  jnp.float32)
    emb_table = emb_table.at[padding_idx].set(0.0)

    # xavier_uniform on square (N, N): U(-sqrt(3/N), sqrt(3/N))
    a_e = (3.0 / embedding_size) ** 0.5
    w_emb = jax.random.uniform(
        k_we, (blocks_num, embedding_size, embedding_size), jnp.float32,
        minval=-a_e, maxval=a_e)
    a_s = (3.0 / seq_len) ** 0.5
    w_seq = jax.random.uniform(
        k_ws, (blocks_num, seq_len, seq_len), jnp.float32,
        minval=-a_s, maxval=a_s)

    # torch initializes step_size to 0.0 (identity blocks); use nonzero
    # "trained" values so the numerical check actually exercises the math.
    step_sizes = 0.25 + 0.5 * jax.random.uniform(k_step, (blocks_num,),
                                                 jnp.float32)

    # Projection: uniform_(0, 1) on (vocab, embedding)
    w_proj = jax.random.uniform(k_proj, (vocab_size, embedding_size),
                                jnp.float32, minval=0.0, maxval=1.0)
    return emb_table, w_emb, w_seq, step_sizes, w_proj


# --------------------------------------------------------------------------
# Pure-JAX reference (mirrors the torch forward exactly) for verification
# --------------------------------------------------------------------------
def reference_forward(tokens, emb_table, w_emb, w_seq, step_sizes, w_proj,
                      *, mask=True):
    hp = lax.Precision.HIGHEST
    S = tokens.shape[1]
    x = jnp.take(emb_table, tokens, axis=0)
    x = jax.nn.softmax(x, axis=-1)
    if mask:
        tri = jnp.triu(jnp.ones((S, S), dtype=bool), k=1)
        w_seq = jnp.where(tri[None, :, :], 0.0, w_seq)
    for k in range(w_emb.shape[0]):
        xs = jnp.einsum('bse,ts->bte', x, w_seq[k], precision=hp)
        fit = jnp.einsum('ef,btf->bte', w_emb[k], xs, precision=hp)
        # torch einsum('b e s, b e s -> b e') on (batch, seq, emb) tensors
        # == sum over the last axis.
        avg = jnp.sum(x * fit, axis=-1, keepdims=True)
        x = jax.nn.relu(x + step_sizes[k] * (x * (fit - avg)))
    return jnp.einsum('mn,ijn->ijm', w_proj, x, precision=hp)


# --------------------------------------------------------------------------
if __name__ == "__main__":
    BLOCKS = 3
    BATCH = 16       # 2 batch tiles of 8 -> bt*S = 128 MXU rows, 2 TC on v7x
    SEQ = 16         # multiple of 8  -> sublane-dense
    EMB = 128        # multiple of 128 -> lane-dense activations
    VOCAB = 128      # multiple of 128 -> lane-dense (unmasked) output stores
    PADDING_IDX = 0
    MASK = True

    key = jax.random.PRNGKey(0)
    k_params, k_tok = jax.random.split(key)
    emb_table, w_emb, w_seq, step_sizes, w_proj = init_params(
        k_params, BLOCKS, SEQ, EMB, VOCAB, PADDING_IDX)
    tokens = jax.random.randint(k_tok, (BATCH, SEQ), 0, VOCAB, dtype=jnp.int32)

    out = replicator_embedding_network_forward(
        tokens, emb_table, w_emb, w_seq, step_sizes, w_proj, mask=MASK)
    out = jax.block_until_ready(out)

    ref = reference_forward(tokens, emb_table, w_emb, w_seq, step_sizes,
                            w_proj, mask=MASK)
    assert out.shape == (BATCH, SEQ, VOCAB), out.shape
    # bf16 MXU inputs + approx reciprocal vs HIGHEST-precision f32 reference
    max_err = float(jnp.max(jnp.abs(out - ref)))
    assert jnp.allclose(out, ref, rtol=2e-2, atol=2e-2), max_err

    print("KERNEL_OK")
</pallas_src>

<mosaic_0001>
module attributes {stable_mosaic.version = 11 : i64} {
  func.func @replicator_fwd_kernel(%arg0: i32, %arg1: i32, %arg2: memref<3xf32, #tpu.memory_space<smem>>, %arg3: memref<128x128xf32, #tpu.memory_space<vmem>>, %arg4: memref<1x128x128xf32, #tpu.memory_space<vmem>>, %arg5: memref<1x128x128xbf16, #tpu.memory_space<vmem>>, %arg6: memref<128x128xbf16, #tpu.memory_space<vmem>>, %arg7: memref<128x128xf32, #tpu.memory_space<vmem>>, %arg8: memref<128x128xf32, #tpu.memory_space<vmem>>) attributes {dimension_semantics = [#tpu.dimension_semantics<parallel>, #tpu.dimension_semantics<arbitrary>], iteration_bounds = array<i64: 2, 3>, scalar_prefetch = 1 : i64, scratch_operands = 1 : i64, tpu.core_type = #tpu.core_type<tc>, window_params = [{transform_indices = @transform_0, window_bounds = array<i64: 128, 128>}, {transform_indices = @transform_1, window_bounds = array<i64: 1, 128, 128>}, {transform_indices = @transform_2, window_bounds = array<i64: 1, 128, 128>}, {pipeline_mode = #tpu.pipeline_mode<synchronous>, transform_indices = @transform_3, window_bounds = array<i64: 128, 128>}, {transform_indices = @transform_4, window_bounds = array<i64: 128, 128>}]} {
    %c0_i32 = arith.constant 0 : i32
    %0 = arith.cmpi eq, %arg1, %c0_i32 : i32
    %1 = arith.extui %0 : i1 to i32
    %c0_i32_0 = arith.constant 0 : i32
    %2 = arith.cmpi ne, %1, %c0_i32_0 : i32
    scf.if %2 {
      %c0_14 = arith.constant 0 : index
      %c0_15 = arith.constant 0 : index
      %28 = vector.load %arg3[%c0_14, %c0_15] : memref<128x128xf32, #tpu.memory_space<vmem>>, vector<128x128xf32>
      %cst_16 = arith.constant dense<0xFF800000> : vector<128xf32>
      %29 = vector.multi_reduction <maximumf>, %28, %cst_16 [1] : vector<128x128xf32> to vector<128xf32>
      %30 = vector.shape_cast %29 : vector<128xf32> to vector<128x1xf32>
      %31 = vector.broadcast %30 : vector<128x1xf32> to vector<128x128xf32>
      %32 = arith.subf %28, %31 : vector<128x128xf32>
      %33 = math.exp %32 : vector<128x128xf32>
      %cst_17 = arith.constant dense<0.000000e+00> : vector<128xf32>
      %34 = vector.multi_reduction <add>, %33, %cst_17 [1] : vector<128x128xf32> to vector<128xf32>
      %35 = vector.shape_cast %34 : vector<128xf32> to vector<128x1xf32>
      %36 = tpu.reciprocal %35 {approx = true} : vector<128x1xf32> -> vector<128x1xf32>
      %37 = vector.broadcast %36 : vector<128x1xf32> to vector<128x128xf32>
      %38 = arith.mulf %33, %37 : vector<128x128xf32>
      %c0_18 = arith.constant 0 : index
      %c0_19 = arith.constant 0 : index
      %39 = vector.load %arg8[%c0_18, %c0_19] : memref<128x128xf32, #tpu.memory_space<vmem>>, vector<128x128xf32>
      tpu.vector_store %arg8[%c0_18, %c0_19], %38 {strides = array<i32>} : memref<128x128xf32, #tpu.memory_space<vmem>>, vector<128x128xf32>,
    } else {
    }
    %c0 = arith.constant 0 : index
    %c0_1 = arith.constant 0 : index
    %3 = vector.load %arg8[%c0, %c0_1] : memref<128x128xf32, #tpu.memory_space<vmem>>, vector<128x128xf32>
    %c0_2 = arith.constant 0 : index
    %c0_3 = arith.constant 0 : index
    %c0_4 = arith.constant 0 : index
    %4 = vector.load %arg4[%c0_2, %c0_3, %c0_4] : memref<1x128x128xf32, #tpu.memory_space<vmem>>, vector<1x128x128xf32>
    %5 = vector.shape_cast %4 : vector<1x128x128xf32> to vector<128x128xf32>
    %c0_5 = arith.constant 0 : index
    %c0_6 = arith.constant 0 : index
    %c0_7 = arith.constant 0 : index
    %6 = vector.load %arg5[%c0_5, %c0_6, %c0_7] : memref<1x128x128xbf16, #tpu.memory_space<vmem>>, vector<1x128x128xbf16>
    %7 = vector.shape_cast %6 : vector<1x128x128xbf16> to vector<128x128xbf16>
    %8 = arith.index_cast %arg1 : i32 to index
    %9 = memref.load %arg2[%8] : memref<3xf32, #tpu.memory_space<smem>>
    %cst = arith.constant dense<0.000000e+00> : vector<128x128xf32>
    %10 = tpu.matmul %5, %3, %cst {dimension_numbers = #tpu.dot_dimension_numbers<[1], [0], [0], [1], [0, 0, 1, 1], [], []>} : vector<128x128xf32>, vector<128x128xf32>, vector<128x128xf32> -> vector<128x128xf32>
    %11 = arith.truncf %10 : vector<128x128xf32> to vector<128x128xbf16>
    %cst_8 = arith.constant dense<0.000000e+00> : vector<128x128xf32>
    %12 = tpu.matmul %11, %7, %cst_8 {dimension_numbers = #tpu.dot_dimension_numbers<[1], [1], [0], [0], [0, 0, 1, 0], [], []>} : vector<128x128xbf16>, vector<128x128xbf16>, vector<128x128xf32> -> vector<128x128xf32>
    %13 = arith.mulf %3, %12 : vector<128x128xf32>
    %cst_9 = arith.constant dense<0.000000e+00> : vector<128xf32>
    %14 = vector.multi_reduction <add>, %13, %cst_9 [1] : vector<128x128xf32> to vector<128xf32>
    %15 = vector.shape_cast %14 : vector<128xf32> to vector<128x1xf32>
    %16 = vector.broadcast %15 : vector<128x1xf32> to vector<128x128xf32>
    %17 = arith.subf %12, %16 : vector<128x128xf32>
    %18 = arith.mulf %3, %17 : vector<128x128xf32>
    %19 = vector.broadcast %9 : f32 to vector<128x128xf32>
    %20 = arith.mulf %19, %18 : vector<128x128xf32>
    %21 = arith.addf %3, %20 : vector<128x128xf32>
    %cst_10 = arith.constant 0.000000e+00 : f32
    %22 = vector.broadcast %cst_10 : f32 to vector<128x128xf32>
    %23 = arith.maximumf %21, %22 : vector<128x128xf32>
    %c0_11 = arith.constant 0 : index
    %c0_12 = arith.constant 0 : index
    %24 = vector.load %arg8[%c0_11, %c0_12] : memref<128x128xf32, #tpu.memory_space<vmem>>, vector<128x128xf32>
    tpu.vector_store %arg8[%c0_11, %c0_12], %23 {strides = array<i32>} : memref<128x128xf32, #tpu.memory_space<vmem>>, vector<128x128xf32>,
    %c2_i32 = arith.constant 2 : i32
    %25 = arith.cmpi eq, %arg1, %c2_i32 : i32
    %26 = arith.extui %25 : i1 to i32
    %c0_i32_13 = arith.constant 0 : i32
    %27 = arith.cmpi ne, %26, %c0_i32_13 : i32
    scf.if %27 {
      %c0_14 = arith.constant 0 : index
      %c0_15 = arith.constant 0 : index
      %28 = vector.load %arg8[%c0_14, %c0_15] : memref<128x128xf32, #tpu.memory_space<vmem>>, vector<128x128xf32>
      %29 = arith.truncf %28 : vector<128x128xf32> to vector<128x128xbf16>
      %c0_16 = arith.constant 0 : index
      %c0_17 = arith.constant 0 : index
      %30 = vector.load %arg6[%c0_16, %c0_17] : memref<128x128xbf16, #tpu.memory_space<vmem>>, vector<128x128xbf16>
      %cst_18 = arith.constant dense<0.000000e+00> : vector<128x128xf32>
      %31 = tpu.matmul %29, %30, %cst_18 {dimension_numbers = #tpu.dot_dimension_numbers<[1], [1], [0], [0], [0, 0, 1, 0], [], []>} : vector<128x128xbf16>, vector<128x128xbf16>, vector<128x128xf32> -> vector<128x128xf32>
      %c0_19 = arith.constant 0 : index
      %c0_20 = arith.constant 0 : index
      %32 = vector.load %arg7[%c0_19, %c0_20] : memref<128x128xf32, #tpu.memory_space<vmem>>, vector<128x128xf32>
      tpu.vector_store %arg7[%c0_19, %c0_20], %31 {strides = array<i32>} : memref<128x128xf32, #tpu.memory_space<vmem>>, vector<128x128xf32>,
    } else {
    }
    return
  }
  func.func @transform_0(%arg0: i32, %arg1: i32, %arg2: memref<3xf32, #tpu.memory_space<smem>>) -> (i32, i32) {
    %c0_i32 = arith.constant 0 : i32
    %c0_i32_0 = arith.constant 0 : i32
    return %arg0, %c0_i32 : i32, i32
  }
  func.func @transform_1(%arg0: i32, %arg1: i32, %arg2: memref<3xf32, #tpu.memory_space<smem>>) -> (i32, i32, i32) {
    %c0_i32 = arith.constant 0 : i32
    %c0_i32_0 = arith.constant 0 : i32
    %c0_i32_1 = arith.constant 0 : i32
    return %arg1, %c0_i32, %c0_i32_0 : i32, i32, i32
  }
  func.func @transform_2(%arg0: i32, %arg1: i32, %arg2: memref<3xf32, #tpu.memory_space<smem>>) -> (i32, i32, i32) {
    %c0_i32 = arith.constant 0 : i32
    %c0_i32_0 = arith.constant 0 : i32
    %c0_i32_1 = arith.constant 0 : i32
    return %arg1, %c0_i32, %c0_i32_0 : i32, i32, i32
  }
  func.func @transform_3(%arg0: i32, %arg1: i32, %arg2: memref<3xf32, #tpu.memory_space<smem>>) -> (i32, i32) {
    %c0_i32 = arith.constant 0 : i32
    %c0_i32_0 = arith.constant 0 : i32
    %c0_i32_1 = arith.constant 0 : i32
    return %c0_i32, %c0_i32_0 : i32, i32
  }
  func.func @transform_4(%arg0: i32, %arg1: i32, %arg2: memref<3xf32, #tpu.memory_space<smem>>) -> (i32, i32) {
    %c0_i32 = arith.constant 0 : i32
    %c0_i32_0 = arith.constant 0 : i32
    return %arg0, %c0_i32 : i32, i32
  }
}

</mosaic_0001>

<llo_original>
// kernel: tpu_custom_call.1
$region0: #{tpu_custom_call.1}
  #allocation0 [shape = 'u32[]', space=smem, size = 0x4, offset = 0x4, fixed_abs, tag = 'smem constant byte address 0x4 - core index']
  #allocation1 [shape = 'u32[144,128]{1,0:T(1,128)}', space=vmem, size = 0x12000, scoped, tag = 'internal scratch']
  #allocation2 [shape = 'f32[128,128]{1,0:T(8,128)}', space=vmem, size = 0x10000, scoped, tag = 'scratch operand']
  #allocation3 [shape = 's32[1]{0}', space=sflag, size = 0x4, scoped, tag = 'scoped memory for tpu_custom_call.1']
  #allocation4 [shape = 'u8[512]{0}', space=smem, size = 0x200, scoped, tag = 'prefetched SMEM operand 0']
  %s0 = inlined_call_operand.hbm [shape: f32[3], index: 0, kind: input, shape index: {}]
  %s1 = inlined_call_operand.hbm [shape: f32[256,128], index: 1, kind: input, shape index: {}]
  %s2 = inlined_call_operand.hbm [shape: f32[3,128,128], index: 2, kind: input, shape index: {}]
  %s3 = inlined_call_operand.hbm [shape: bf16[3,128,128], index: 3, kind: input, shape index: {}]
  %s4 = inlined_call_operand.hbm [shape: bf16[128,128], index: 4, kind: input, shape index: {}]
  %s5 = inlined_call_operand.hbm [shape: f32[256,128], index: 5, kind: output, shape index: {}]
  %s6 = sld [smem:[#allocation0]]
  $region73: #{tpu_custom_call.1} parent=0
    _
  %s8 = ssub.s32 1, %s6
  %s9 = scalar_select 0, %s8, %s6
  %11 = dma.hbm_to_smem %s0, 16, [#allocation4], [#allocation3]
  %12 = dma.done [#allocation3], 16
  %13 = sfence
  $region1: #{tpu_custom_call.1} parent=0
    #allocation5 [shape = 'u8[131072]{0}', space=vmem, size = 0x20000, scoped, tag = 'input window, operand 1']
    #allocation6 [shape = 's32[2]{0}', space=sflag, size = 0x8, scoped, tag = 'scoped memory for tpu_custom_call.1']
    #allocation7 [shape = 's32[2]{0}', space=sflag, size = 0x8, scoped, tag = 'scoped memory for tpu_custom_call.1']
    #allocation8 [shape = 'u8[131072]{0}', space=vmem, size = 0x20000, scoped, tag = 'input window, operand 2']
    #allocation9 [shape = 's32[2]{0}', space=sflag, size = 0x8, scoped, tag = 'scoped memory for tpu_custom_call.1']
    #allocation10 [shape = 'u8[65536]{0}', space=vmem, size = 0x10000, scoped, tag = 'input window, operand 3']
    #allocation11 [shape = 'u8[32768]{0}', space=vmem, size = 0x8000, scoped, tag = 'input window, operand 4, single buffered']
    #allocation12 [shape = 's32[1]{0}', space=sflag, size = 0x4, scoped, tag = 'scoped memory for tpu_custom_call.1']
    #allocation13 [shape = 'u8[131072]{0}', space=vmem, size = 0x20000, scoped, tag = 'output window, operand 0']
    %14 = vsyncpa [#allocation6], 0
    %s15 = scalar_lea.sflag [#allocation6], 1
    %16 = vsyncpa %s15, 0
    %17 = vsyncpa [#allocation9], 0
    %s18 = scalar_lea.sflag [#allocation9], 1
    %19 = vsyncpa %s18, 0
    %20 = vsyncpa [#allocation12], 0
    %21 = vsyncpa [#allocation7], 0
    %s22 = scalar_lea.sflag [#allocation7], 1
    %23 = vsyncpa %s22, 0
    loop: start=0, step=1, limit=8
    $region2: #{tpu_custom_call.1} parent=1 // loop_pre_header
      _
    $region3: #{tpu_custom_call.1} parent=1 // loop_header
      %s25 = sphi 0, %s29
      %p26 = scmp.ge.s32.totalorder %s25, 8
      %s32 = sphi 0, %s44
      %s33 = sphi 0, %s40
      %s34 = sphi 0, %s32
      %s35 = sphi 0, %s33
      %s36 = sphi 0, %s34
      %s37 = sphi 0, %s35
      %s47 = sphi 0, %s49
      %s50 = sphi 0, %s47
      %s51 = sphi 0, %s50
      %s67 = sphi 0, %s51
      %s73 = sphi 0, %s75
      %s76 = sphi 0, %s73
      %s77 = sphi 0, %s76
      %s93 = sphi 0, %s77
      %s99 = sphi 0, %s101
      %s102 = sphi 0, %s99
      %s103 = sphi 0, %s102
      %s119 = sphi 0, %s103
      %s123 = sphi 0, %s123
      %s125 = sphi 0, %s123
      %s126 = sphi 0, %s125
      %s140 = sphi 0, %s126
      %s146 = sphi 0, %s148
      %s149 = sphi 0, %s146
      %s150 = sphi 0, %s149
      %s166 = sphi 0, %s150
    $region4: #{tpu_custom_call.1} parent=1 // loop_header_branch
      %28 = sbr.rel (%p26) target = $region8
    $region5: #{tpu_custom_call.1} parent=1 // loop_body
      %s30 = ssub.s32 %s25, 1
      %s31 = ssub.s32 %s25, 2
      %s38 = sadd.s32 1, %s33
      %p39 = scmp.ge.s32.totalorder %s38, 3
      %s40 = scalar_select %p39, 0, %s38
      %s41 = sadd.s32 1, %s32
      %s42 = scalar_select %p39, %s41, %s32
      %p43 = scmp.ge.s32.totalorder %s42, 2
      %s44 = scalar_select %p43, 0, %s42
      %s45 = ssub.s32 %s32, %s44
      %p46 = scmp.eq.s32.totalorder %s45, 0
      %s48 = sadd.s32 %s47, 1
      %s49 = scalar_select %p46, %s47, %s48
      %p52 = pneg %p46
      %p53 = scmp.eq.s32.totalorder %s25, 5
      %p54 = por %p52, %p53
      %p55 = scmp.ne.s32.totalorder %s47, %s50
      %p56 = scmp.eq.s32.totalorder %s25, 0
      %p57 = por %p55, %p56
      %p58 = scmp.ne.s32.totalorder %s47, %s50
      %p59 = scmp.eq.s32.totalorder %s30, 5
      %p60 = por %p58, %p59
      %p61 = scmp.ne.s32.totalorder %s50, %s51
      %p62 = scmp.eq.s32.totalorder %s30, 0
      %p63 = por %p61, %p62
      %p64 = scmp.ne.s32.totalorder %s50, %s51
      %p65 = scmp.eq.s32.totalorder %s31, 5
      %p66 = por %p64, %p65
      %p68 = scmp.ne.s32.totalorder %s51, %s67
      %p69 = scmp.eq.s32.totalorder %s31, 0
      %p70 = por %p68, %p69
      %s71 = ssub.s32 %s33, %s40
      %p72 = scmp.eq.s32.totalorder %s71, 0
      %s74 = sadd.s32 %s73, 1
      %s75 = scalar_select %p72, %s73, %s74
      %p78 = pneg %p72
      %p79 = scmp.eq.s32.totalorder %s25, 5
      %p80 = por %p78, %p79
      %p81 = scmp.ne.s32.totalorder %s73, %s76
      %p82 = scmp.eq.s32.totalorder %s25, 0
      %p83 = por %p81, %p82
      %p84 = scmp.ne.s32.totalorder %s73, %s76
      %p85 = scmp.eq.s32.totalorder %s30, 5
      %p86 = por %p84, %p85
      %p87 = scmp.ne.s32.totalorder %s76, %s77
      %p88 = scmp.eq.s32.totalorder %s30, 0
      %p89 = por %p87, %p88
      %p90 = scmp.ne.s32.totalorder %s76, %s77
      %p91 = scmp.eq.s32.totalorder %s31, 5
      %p92 = por %p90, %p91
      %p94 = scmp.ne.s32.totalorder %s77, %s93
      %p95 = scmp.eq.s32.totalorder %s31, 0
      %p96 = por %p94, %p95
      %s97 = ssub.s32 %s33, %s40
      %p98 = scmp.eq.s32.totalorder %s97, 0
      %s100 = sadd.s32 %s99, 1
      %s101 = scalar_select %p98, %s99, %s100
      %p104 = pneg %p98
      %p105 = scmp.eq.s32.totalorder %s25, 5
      %p106 = por %p104, %p105
      %p107 = scmp.ne.s32.totalorder %s99, %s102
      %p108 = scmp.eq.s32.totalorder %s25, 0
      %p109 = por %p107, %p108
      %p110 = scmp.ne.s32.totalorder %s99, %s102
      %p111 = scmp.eq.s32.totalorder %s30, 5
      %p112 = por %p110, %p111
      %p113 = scmp.ne.s32.totalorder %s102, %s103
      %p114 = scmp.eq.s32.totalorder %s30, 0
      %p115 = por %p113, %p114
      %p116 = scmp.ne.s32.totalorder %s102, %s103
      %p117 = scmp.eq.s32.totalorder %s31, 5
      %p118 = por %p116, %p117
      %p120 = scmp.ne.s32.totalorder %s103, %s119
      %p121 = scmp.eq.s32.totalorder %s31, 0
      %p122 = por %p120, %p121
      %s124 = sadd.s32 %s123, 1
      %p127 = scmp.eq.s32.totalorder %s25, 5
      %p128 = scmp.ne.s32.totalorder %s123, %s125
      %p129 = scmp.eq.s32.totalorder %s25, 0
      %p130 = por %p128, %p129
      %p131 = scmp.ne.s32.totalorder %s123, %s125
      %p132 = scmp.eq.s32.totalorder %s30, 5
      %p133 = por %p131, %p132
      %p134 = scmp.ne.s32.totalorder %s125, %s126
      %p135 = scmp.eq.s32.totalorder %s30, 0
      %p136 = por %p134, %p135
      %p137 = scmp.ne.s32.totalorder %s125, %s126
      %p138 = scmp.eq.s32.totalorder %s31, 5
      %p139 = por %p137, %p138
      %p141 = scmp.ne.s32.totalorder %s126, %s140
      %p142 = scmp.eq.s32.totalorder %s31, 0
      %p143 = por %p141, %p142
      %s144 = ssub.s32 %s32, %s44
      %p145 = scmp.eq.s32.totalorder %s144, 0
      %s147 = sadd.s32 %s146, 1
      %s148 = scalar_select %p145, %s146, %s147
      %p151 = pneg %p145
      %p152 = scmp.eq.s32.totalorder %s25, 5
      %p153 = por %p151, %p152
      %p154 = scmp.ne.s32.totalorder %s146, %s149
      %p155 = scmp.eq.s32.totalorder %s25, 0
      %p156 = por %p154, %p155
      %p157 = scmp.ne.s32.totalorder %s146, %s149
      %p158 = scmp.eq.s32.totalorder %s30, 5
      %p159 = por %p157, %p158
      %p160 = scmp.ne.s32.totalorder %s149, %s150
      %p161 = scmp.eq.s32.totalorder %s30, 0
      %p162 = por %p160, %p161
      %p163 = scmp.ne.s32.totalorder %s149, %s150
      %p164 = scmp.eq.s32.totalorder %s31, 5
      %p165 = por %p163, %p164
      %p167 = scmp.ne.s32.totalorder %s150, %s166
      %p168 = scmp.eq.s32.totalorder %s31, 0
      %p169 = por %p167, %p168
      %p170 = scmp.le.s32.totalorder 1, %s25
      %p171 = scmp.lt.s32.totalorder %s25, 7
      %p172 = pnand %p170, %p171
      %p173 = pneg %p172
      // Predicated region
      $region9: #{tpu_custom_call.1} parent=5 // pred_check
        _
      $region10: #{tpu_custom_call.1} parent=5 // pred_check_branch
        %175 = sbr.rel (%p172) target = $region12
      $region11: #{tpu_custom_call.1} parent=5 // pred_region
        %s176 = ssub.s32 %s25, 1
        // Predicated region
        $region13: #{tpu_custom_call.1} parent=11 // pred_check
          %p177 = pneg %p136
        $region14: #{tpu_custom_call.1} parent=11 // pred_check_branch
          %179 = sbr.rel (%p177) target = $region16
        $region15: #{tpu_custom_call.1} parent=11 // pred_region
          %s181 = ssub.s32 1024, 1024
          %182 = vsyncadd [#allocation12], %s181
          %s183 = sshll.u32 [#allocation11], 4
          %s184 = int_to_ptr.vmem [resolvable:$true] %s183
          %189 = dma.hbm_to_vmem [thread:$0]  %s4, 1024, %s184, [#allocation12], 64, 64, 4
        $region16: #{tpu_custom_call.1} parent=11 // pred_fallthru
          _
      $region12: #{tpu_custom_call.1} parent=5 // pred_fallthru
        _
      %p190 = scmp.lt.s32.totalorder %s25, 6
      // Predicated region
      $region17: #{tpu_custom_call.1} parent=5 // pred_check
        %p191 = pneg %p190
      $region18: #{tpu_custom_call.1} parent=5 // pred_check_branch
        %193 = sbr.rel (%p191) target = $region20
      $region19: #{tpu_custom_call.1} parent=5 // pred_region
        // Predicated region
        $region21: #{tpu_custom_call.1} parent=19 // pred_check
          %p194 = pneg %p57
        $region22: #{tpu_custom_call.1} parent=19 // pred_check_branch
          %196 = sbr.rel (%p194) target = $region24
        $region23: #{tpu_custom_call.1} parent=19 // pred_region
          %s197 = sand.u32 %s47, 1
          %s198 = scalar_lea.sflag [#allocation6], %s197
          %s199 = sand.u32 %s47, 1
          %s200 = smul.addr %s199, 128
          %s201 = scalar_lea.vmem [#allocation5], %s200
          %s202 = smul.u32 16, %s32
          %s204 = ssub.s32 2048, 2048
          %205 = vsyncadd %s198, %s204
          %s206 = smul.addr %s202, 128
          %s207 = scalar_lea.hbm %s1, %s206
          %s208 = sshll.u32 %s201, 4
          %s209 = int_to_ptr.vmem [resolvable:$true] %s208
          %214 = dma.hbm_to_vmem [thread:$0]  %s207, 2048, %s209, %s198, 128, 128, 8
        $region24: #{tpu_custom_call.1} parent=19 // pred_fallthru
          _
        // Predicated region
        $region25: #{tpu_custom_call.1} parent=19 // pred_check
          %p215 = pneg %p83
        $region26: #{tpu_custom_call.1} parent=19 // pred_check_branch
          %217 = sbr.rel (%p215) target = $region28
        $region27: #{tpu_custom_call.1} parent=19 // pred_region
          %s218 = sand.u32 %s25, 1
          %s219 = scalar_lea.sflag [#allocation9], %s218
          %s220 = sand.u32 %s73, 1
          %s221 = smul.addr %s220, 128
          %s222 = scalar_lea.vmem [#allocation8], %s221
          %s224 = ssub.s32 2048, 2048
          %225 = vsyncadd %s219, %s224
          %s226 = smul.addr %s33, 16
          %s227 = smul.addr %s226, 128
          %s228 = scalar_lea.hbm %s2, %s227
          %s229 = sshll.u32 %s222, 4
          %s230 = int_to_ptr.vmem [resolvable:$true] %s229
          %235 = dma.hbm_to_vmem [thread:$0]  %s228, 2048, %s230, %s219, 128, 128, 8
        $region28: #{tpu_custom_call.1} parent=19 // pred_fallthru
          _
        // Predicated region
        $region29: #{tpu_custom_call.1} parent=19 // pred_check
          %p236 = pneg %p109
        $region30: #{tpu_custom_call.1} parent=19 // pred_check_branch
          %238 = sbr.rel (%p236) target = $region32
        $region31: #{tpu_custom_call.1} parent=19 // pred_region
          %s239 = sand.u32 %s25, 1
          %s240 = scalar_lea.sflag [#allocation9], %s239
          %s241 = sand.u32 %s99, 1
          %s242 = smul.addr %s241, 64
          %s243 = scalar_lea.vmem [#allocation10], %s242
          %s245 = ssub.s32 1024, 1024
          %246 = vsyncadd %s240, %s245
          %s247 = smul.addr %s33, 16
          %s248 = smul.addr %s247, 64
          %s249 = scalar_lea.hbm %s3, %s248
          %s250 = sshll.u32 %s243, 4
          %s251 = int_to_ptr.vmem [resolvable:$true] %s250
          %256 = dma.hbm_to_vmem [thread:$0]  %s249, 1024, %s251, %s240, 64, 64, 4
        $region32: #{tpu_custom_call.1} parent=19 // pred_fallthru
          _
      $region20: #{tpu_custom_call.1} parent=5 // pred_fallthru
        _
      %p257 = scmp.le.s32.totalorder 1, %s25
      %p258 = scmp.lt.s32.totalorder %s25, 7
      %p259 = pnand %p257, %p258
      %p260 = pneg %p259
      // Predicated region
      $region33: #{tpu_custom_call.1} parent=5 // pred_check
        _
      $region34: #{tpu_custom_call.1} parent=5 // pred_check_branch
        %262 = sbr.rel (%p259) target = $region36
      $region35: #{tpu_custom_call.1} parent=5 // pred_region
        %s263 = ssub.s32 %s25, 1
        %s264 = sand.u32 %s50, 1
        %s265 = scalar_lea.sflag [#allocation6], %s264
        %s266 = sand.u32 %s50, 1
        %s267 = smul.addr %s266, 128
        %s268 = scalar_lea.vmem [#allocation5], %s267
        // Predicated region
        $region37: #{tpu_custom_call.1} parent=35 // pred_check
          %p269 = pneg %p63
        $region38: #{tpu_custom_call.1} parent=35 // pred_check_branch
          %271 = sbr.rel (%p269) target = $region40
        $region39: #{tpu_custom_call.1} parent=35 // pred_region
          %272 = dma.done %s265, 2048
        $region40: #{tpu_custom_call.1} parent=35 // pred_fallthru
          _
        %s273 = sand.u32 %s30, 1
        %s274 = scalar_lea.sflag [#allocation9], %s273
        %s275 = sand.u32 %s76, 1
        %s276 = smul.addr %s275, 128
        %s277 = scalar_lea.vmem [#allocation8], %s276
        // Predicated region
        $region41: #{tpu_custom_call.1} parent=35 // pred_check
          %p278 = pneg %p89
        $region42: #{tpu_custom_call.1} parent=35 // pred_check_branch
          %280 = sbr.rel (%p278) target = $region44
        $region43: #{tpu_custom_call.1} parent=35 // pred_region
          %281 = dma.done %s274, 2048
        $region44: #{tpu_custom_call.1} parent=35 // pred_fallthru
          _
        %s282 = sand.u32 %s30, 1
        %s283 = scalar_lea.sflag [#allocation9], %s282
        %s284 = sand.u32 %s102, 1
        %s285 = smul.addr %s284, 64
        %s286 = scalar_lea.vmem [#allocation10], %s285
        // Predicated region
        $region45: #{tpu_custom_call.1} parent=35 // pred_check
          %p287 = pneg %p115
        $region46: #{tpu_custom_call.1} parent=35 // pred_check_branch
          %289 = sbr.rel (%p287) target = $region48
        $region47: #{tpu_custom_call.1} parent=35 // pred_region
          %290 = dma.done %s283, 1024
        $region48: #{tpu_custom_call.1} parent=35 // pred_fallthru
          _
        // Predicated region
        $region49: #{tpu_custom_call.1} parent=35 // pred_check
          %p291 = pneg %p136
        $region50: #{tpu_custom_call.1} parent=35 // pred_check_branch
          %293 = sbr.rel (%p291) target = $region52
        $region51: #{tpu_custom_call.1} parent=35 // pred_region
          %294 = dma.done [#allocation12], 1024
        $region52: #{tpu_custom_call.1} parent=35 // pred_fallthru
          _
        %s295 = sand.u32 %s50, 1
        %s296 = scalar_lea.sflag [#allocation6], %s295
        %s297 = sand.u32 %s50, 1
        %s298 = smul.addr %s297, 128
        %s299 = scalar_lea.vmem [#allocation5], %s298
        %p300 = pneg %p63
        %p301 = pneg %p60
        %s302 = sand.u32 %s30, 1
        %s303 = scalar_lea.sflag [#allocation9], %s302
        %s304 = sand.u32 %s76, 1
        %s305 = smul.addr %s304, 128
        %s306 = scalar_lea.vmem [#allocation8], %s305
        %p307 = pneg %p89
        %p308 = pneg %p86
        %s309 = sand.u32 %s30, 1
        %s310 = scalar_lea.sflag [#allocation9], %s309
        %s311 = sand.u32 %s102, 1
        %s312 = smul.addr %s311, 64
        %s313 = scalar_lea.vmem [#allocation10], %s312
        %p314 = pneg %p115
        %p315 = pneg %p112
        %p316 = pneg %p136
        %p317 = pneg %p133
        %p318 = pneg %p162
        %p319 = pneg %p159
        %s320 = sand.u32 %s149, 1
        %s321 = scalar_lea.sflag [#allocation7], %s320
        %s322 = sand.u32 %s149, 1
        %s323 = smul.addr %s322, 128
        %s324 = scalar_lea.vmem [#allocation13], %s323
        %s325 = smul.u32 16, %s34
        %s326 = smul.u32 16, %s34
        %p328 = scmp.eq.s32.totalorder %s35, 0
        // Predicated region
        $region53: #{tpu_custom_call.1} parent=35 // pred_check
          %p329 = pneg %p328
        $region54: #{tpu_custom_call.1} parent=35 // pred_check_branch
          %331 = sbr.rel (%p329) target = $region56
        $region55: #{tpu_custom_call.1} parent=35 // pred_region
          %v332 = vld [vmem:[%s268] sm:$0xff]
          %v333 = vld [vmem:[%s268 + $0x8] sm:$0xff]
          %v334 = vld [vmem:[%s268 + $0x10] sm:$0xff]
          %v335 = vld [vmem:[%s268 + $0x18] sm:$0xff]
          %v336 = vld [vmem:[%s268 + $0x20] sm:$0xff]
          %v337 = vld [vmem:[%s268 + $0x28] sm:$0xff]
          %v338 = vld [vmem:[%s268 + $0x30] sm:$0xff]
          %v339 = vld [vmem:[%s268 + $0x38] sm:$0xff]
          %v340 = vld [vmem:[%s268 + $0x40] sm:$0xff]
          %v341 = vld [vmem:[%s268 + $0x48] sm:$0xff]
          %v342 = vld [vmem:[%s268 + $0x50] sm:$0xff]
          %v343 = vld [vmem:[%s268 + $0x58] sm:$0xff]
          %v344 = vld [vmem:[%s268 + $0x60] sm:$0xff]
          %v345 = vld [vmem:[%s268 + $0x68] sm:$0xff]
          %v346 = vld [vmem:[%s268 + $0x70] sm:$0xff]
          %v347 = vld [vmem:[%s268 + $0x78] sm:$0xff]
          %348 = vmax.xlane.f32.xlu0 %v332
          %v349 = vpop.xlane.xlu0 %348
          %350 = vmax.xlane.f32.xlu0 %v333
          %v351 = vpop.xlane.xlu0 %350
          %352 = vmax.xlane.f32.xlu0 %v334
          %v353 = vpop.xlane.xlu0 %352
          %354 = vmax.xlane.f32.xlu0 %v335
          %v355 = vpop.xlane.xlu0 %354
          %356 = vmax.xlane.f32.xlu0 %v336
          %v357 = vpop.xlane.xlu0 %356
          %358 = vmax.xlane.f32.xlu0 %v337
          %v359 = vpop.xlane.xlu0 %358
          %360 = vmax.xlane.f32.xlu0 %v338
          %v361 = vpop.xlane.xlu0 %360
          %362 = vmax.xlane.f32.xlu0 %v339
          %v363 = vpop.xlane.xlu0 %362
          %364 = vmax.xlane.f32.xlu0 %v340
          %v365 = vpop.xlane.xlu0 %364
          %366 = vmax.xlane.f32.xlu0 %v341
          %v367 = vpop.xlane.xlu0 %366
          %368 = vmax.xlane.f32.xlu0 %v342
          %v369 = vpop.xlane.xlu0 %368
          %370 = vmax.xlane.f32.xlu0 %v343
          %v371 = vpop.xlane.xlu0 %370
          %372 = vmax.xlane.f32.xlu0 %v344
          %v373 = vpop.xlane.xlu0 %372
          %374 = vmax.xlane.f32.xlu0 %v345
          %v375 = vpop.xlane.xlu0 %374
          %376 = vmax.xlane.f32.xlu0 %v346
          %v377 = vpop.xlane.xlu0 %376
          %378 = vmax.xlane.f32.xlu0 %v347
          %v379 = vpop.xlane.xlu0 %378
          %v380 = vsub.f32 %v332, %v349
          %v381 = vsub.f32 %v333, %v351
          %v382 = vsub.f32 %v334, %v353
          %v383 = vsub.f32 %v335, %v355
          %v384 = vsub.f32 %v336, %v357
          %v385 = vsub.f32 %v337, %v359
          %v386 = vsub.f32 %v338, %v361
          %v387 = vsub.f32 %v339, %v363
          %v388 = vsub.f32 %v340, %v365
          %v389 = vsub.f32 %v341, %v367
          %v390 = vsub.f32 %v342, %v369
          %v391 = vsub.f32 %v343, %v371
          %v392 = vsub.f32 %v344, %v373
          %v393 = vsub.f32 %v345, %v375
          %v394 = vsub.f32 %v346, %v377
          %v395 = vsub.f32 %v347, %v379
          %v396 = vmul.f32 %v380, 1.442695
          %v397 = vpow.pop %v396
          %v398 = vmul.f32 %v381, 1.442695
          %v399 = vpow.pop %v398
          %v400 = vmul.f32 %v382, 1.442695
          %v401 = vpow.pop %v400
          %v402 = vmul.f32 %v383, 1.442695
          %v403 = vpow.pop %v402
          %v404 = vmul.f32 %v384, 1.442695
          %v405 = vpow.pop %v404
          %v406 = vmul.f32 %v385, 1.442695
          %v407 = vpow.pop %v406
          %v408 = vmul.f32 %v386, 1.442695
          %v409 = vpow.pop %v408
          %v410 = vmul.f32 %v387, 1.442695
          %v411 = vpow.pop %v410
          %v412 = vmul.f32 %v388, 1.442695
          %v413 = vpow.pop %v412
          %v414 = vmul.f32 %v389, 1.442695
          %v415 = vpow.pop %v414
          %v416 = vmul.f32 %v390, 1.442695
          %v417 = vpow.pop %v416
          %v418 = vmul.f32 %v391, 1.442695
          %v419 = vpow.pop %v418
          %v420 = vmul.f32 %v392, 1.442695
          %v421 = vpow.pop %v420
          %v422 = vmul.f32 %v393, 1.442695
          %v423 = vpow.pop %v422
          %v424 = vmul.f32 %v394, 1.442695
          %v425 = vpow.pop %v424
          %v426 = vmul.f32 %v395, 1.442695
          %v427 = vpow.pop %v426
          %428 = vadd.xlane.f32.xlu0 %v397
          %v429 = vpop.xlane.xlu0 %428
          %430 = vadd.xlane.f32.xlu0 %v399
          %v431 = vpop.xlane.xlu0 %430
          %432 = vadd.xlane.f32.xlu0 %v401
          %v433 = vpop.xlane.xlu0 %432
          %434 = vadd.xlane.f32.xlu0 %v403
          %v435 = vpop.xlane.xlu0 %434
          %436 = vadd.xlane.f32.xlu0 %v405
          %v437 = vpop.xlane.xlu0 %436
          %438 = vadd.xlane.f32.xlu0 %v407
          %v439 = vpop.xlane.xlu0 %438
          %440 = vadd.xlane.f32.xlu0 %v409
          %v441 = vpop.xlane.xlu0 %440
          %442 = vadd.xlane.f32.xlu0 %v411
          %v443 = vpop.xlane.xlu0 %442
          %444 = vadd.xlane.f32.xlu0 %v413
          %v445 = vpop.xlane.xlu0 %444
          %446 = vadd.xlane.f32.xlu0 %v415
          %v447 = vpop.xlane.xlu0 %446
          %448 = vadd.xlane.f32.xlu0 %v417
          %v449 = vpop.xlane.xlu0 %448
          %450 = vadd.xlane.f32.xlu0 %v419
          %v451 = vpop.xlane.xlu0 %450
          %452 = vadd.xlane.f32.xlu0 %v421
          %v453 = vpop.xlane.xlu0 %452
          %454 = vadd.xlane.f32.xlu0 %v423
          %v455 = vpop.xlane.xlu0 %454
          %456 = vadd.xlane.f32.xlu0 %v425
          %v457 = vpop.xlane.xlu0 %456
          %458 = vadd.xlane.f32.xlu0 %v427
          %v459 = vpop.xlane.xlu0 %458
          %v460 = vrcp.pop %v429
          %v461 = vrcp.pop %v431
          %v462 = vrcp.pop %v433
          %v463 = vrcp.pop %v435
          %v464 = vrcp.pop %v437
          %v465 = vrcp.pop %v439
          %v466 = vrcp.pop %v441
          %v467 = vrcp.pop %v443
          %v468 = vrcp.pop %v445
          %v469 = vrcp.pop %v447
          %v470 = vrcp.pop %v449
          %v471 = vrcp.pop %v451
          %v472 = vrcp.pop %v453
          %v473 = vrcp.pop %v455
          %v474 = vrcp.pop %v457
          %v475 = vrcp.pop %v459
          %v476 = vmul.f32 %v397, %v460
          %v477 = vmul.f32 %v399, %v461
          %v478 = vmul.f32 %v401, %v462
          %v479 = vmul.f32 %v403, %v463
          %v480 = vmul.f32 %v405, %v464
          %v481 = vmul.f32 %v407, %v465
          %v482 = vmul.f32 %v409, %v466
          %v483 = vmul.f32 %v411, %v467
          %v484 = vmul.f32 %v413, %v468
          %v485 = vmul.f32 %v415, %v469
          %v486 = vmul.f32 %v417, %v470
          %v487 = vmul.f32 %v419, %v471
          %v488 = vmul.f32 %v421, %v472
          %v489 = vmul.f32 %v423, %v473
          %v490 = vmul.f32 %v425, %v474
          %v491 = vmul.f32 %v427, %v475
          %492 = vst [vmem:[#allocation2] sm:$0xff] %v476
          %493 = vst [vmem:[#allocation2 + $0x8] sm:$0xff] %v477
          %494 = vst [vmem:[#allocation2 + $0x10] sm:$0xff] %v478
          %495 = vst [vmem:[#allocation2 + $0x18] sm:$0xff] %v479
          %496 = vst [vmem:[#allocation2 + $0x20] sm:$0xff] %v480
          %497 = vst [vmem:[#allocation2 + $0x28] sm:$0xff] %v481
          %498 = vst [vmem:[#allocation2 + $0x30] sm:$0xff] %v482
          %499 = vst [vmem:[#allocation2 + $0x38] sm:$0xff] %v483
          %500 = vst [vmem:[#allocation2 + $0x40] sm:$0xff] %v484
          %501 = vst [vmem:[#allocation2 + $0x48] sm:$0xff] %v485
          %502 = vst [vmem:[#allocation2 + $0x50] sm:$0xff] %v486
          %503 = vst [vmem:[#allocation2 + $0x58] sm:$0xff] %v487
          %504 = vst [vmem:[#allocation2 + $0x60] sm:$0xff] %v488
          %505 = vst [vmem:[#allocation2 + $0x68] sm:$0xff] %v489
          %506 = vst [vmem:[#allocation2 + $0x70] sm:$0xff] %v490
          %507 = vst [vmem:[#allocation2 + $0x78] sm:$0xff] %v491
        $region56: #{tpu_custom_call.1} parent=35 // pred_fallthru
          _
        %v508 = vld [vmem:[#allocation2] sm:$0xff]
        %v509 = vld [vmem:[#allocation2 + $0x8] sm:$0xff]
        %v510 = vld [vmem:[#allocation2 + $0x10] sm:$0xff]
        %v511 = vld [vmem:[#allocation2 + $0x18] sm:$0xff]
        %v512 = vld [vmem:[#allocation2 + $0x20] sm:$0xff]
        %v513 = vld [vmem:[#allocation2 + $0x28] sm:$0xff]
        %v514 = vld [vmem:[#allocation2 + $0x30] sm:$0xff]
        %v515 = vld [vmem:[#allocation2 + $0x38] sm:$0xff]
        %v516 = vld [vmem:[#allocation2 + $0x40] sm:$0xff]
        %v517 = vld [vmem:[#allocation2 + $0x48] sm:$0xff]
        %v518 = vld [vmem:[#allocation2 + $0x50] sm:$0xff]
        %v519 = vld [vmem:[#allocation2 + $0x58] sm:$0xff]
        %v520 = vld [vmem:[#allocation2 + $0x60] sm:$0xff]
        %v521 = vld [vmem:[#allocation2 + $0x68] sm:$0xff]
        %v522 = vld [vmem:[#allocation2 + $0x70] sm:$0xff]
        %v523 = vld [vmem:[#allocation2 + $0x78] sm:$0xff]
        %v524 = vld [vmem:[%s277] sm:$0xff]
        %v525 = vld [vmem:[%s277 + $0x8] sm:$0xff]
        %v526 = vld [vmem:[%s277 + $0x10] sm:$0xff]
        %v527 = vld [vmem:[%s277 + $0x18] sm:$0xff]
        %v528 = vld [vmem:[%s277 + $0x20] sm:$0xff]
        %v529 = vld [vmem:[%s277 + $0x28] sm:$0xff]
        %v530 = vld [vmem:[%s277 + $0x30] sm:$0xff]
        %v531 = vld [vmem:[%s277 + $0x38] sm:$0xff]
        %v532 = vld [vmem:[%s277 + $0x40] sm:$0xff]
        %v533 = vld [vmem:[%s277 + $0x48] sm:$0xff]
        %v534 = vld [vmem:[%s277 + $0x50] sm:$0xff]
        %v535 = vld [vmem:[%s277 + $0x58] sm:$0xff]
        %v536 = vld [vmem:[%s277 + $0x60] sm:$0xff]
        %v537 = vld [vmem:[%s277 + $0x68] sm:$0xff]
        %v538 = vld [vmem:[%s277 + $0x70] sm:$0xff]
        %v539 = vld [vmem:[%s277 + $0x78] sm:$0xff]
        %v540 = vld [vmem:[%s286] sm:$0xf]
        %v541 = vld [vmem:[%s286 + $0x4] sm:$0xf]
        %v542 = vld [vmem:[%s286 + $0x8] sm:$0xf]
        %v543 = vld [vmem:[%s286 + $0xc] sm:$0xf]
        %v544 = vld [vmem:[%s286 + $0x10] sm:$0xf]
        %v545 = vld [vmem:[%s286 + $0x14] sm:$0xf]
        %v546 = vld [vmem:[%s286 + $0x18] sm:$0xf]
        %v547 = vld [vmem:[%s286 + $0x1c] sm:$0xf]
        %v548 = vld [vmem:[%s286 + $0x20] sm:$0xf]
        %v549 = vld [vmem:[%s286 + $0x24] sm:$0xf]
        %v550 = vld [vmem:[%s286 + $0x28] sm:$0xf]
        %v551 = vld [vmem:[%s286 + $0x2c] sm:$0xf]
        %v552 = vld [vmem:[%s286 + $0x30] sm:$0xf]
        %v553 = vld [vmem:[%s286 + $0x34] sm:$0xf]
        %v554 = vld [vmem:[%s286 + $0x38] sm:$0xf]
        %v555 = vld [vmem:[%s286 + $0x3c] sm:$0xf]
        %s556 = sld [smem:[#allocation4 + %s35]]
        %557 = vmatprep.subr.mxu0 0.0
        %558 = vmatpush1.msra.mxu0 %v523
        %559 = vmatprep.subr.mxu0 0.0
        %560 = vmatpush1.msra.mxu0 %v522
        %561 = vmatprep.subr.mxu0 0.0
        %562 = vmatpush1.msra.mxu0 %v521
        %563 = vmatprep.subr.mxu0 0.0
        %564 = vmatpush1.msra.mxu0 %v520
        %565 = vmatprep.subr.mxu0 0.0
        %566 = vmatpush1.msra.mxu0 %v519
        %567 = vmatprep.subr.mxu0 0.0
        %568 = vmatpush1.msra.mxu0 %v518
        %569 = vmatprep.subr.mxu0 0.0
        %570 = vmatpush1.msra.mxu0 %v517
        %571 = vmatprep.subr.mxu0 0.0
        %572 = vmatpush1.msra.mxu0 %v516
        %573 = vmatprep.subr.mxu0 0.0
        %574 = vmatpush1.msra.mxu0 %v515
        %575 = vmatprep.subr.mxu0 0.0
        %576 = vmatpush1.msra.mxu0 %v514
        %577 = vmatprep.subr.mxu0 0.0
        %578 = vmatpush1.msra.mxu0 %v513
        %579 = vmatprep.subr.mxu0 0.0
        %580 = vmatpush1.msra.mxu0 %v512
        %581 = vmatprep.subr.mxu0 0.0
        %582 = vmatpush1.msra.mxu0 %v511
        %583 = vmatprep.subr.mxu0 0.0
        %584 = vmatpush1.msra.mxu0 %v510
        %585 = vmatprep.subr.mxu0 0.0
        %586 = vmatpush1.msra.mxu0 %v509
        %587 = vmatprep.subr.mxu0 0.0
        %588 = vmatpush1.msra.mxu0 %v508
        %589 = vmatprep.subr.mxu0 0.0
        %590 = vmatpush2.msra.mxu0 0.0
        %591 = vmatprep.subr.mxu0 0.0
        %592 = vmatpush2.msra.mxu0 0.0
        %593 = vmatprep.subr.mxu0 0.0
        %594 = vmatpush2.msra.mxu0 0.0
        %595 = vmatprep.subr.mxu0 0.0
        %596 = vmatpush2.msra.mxu0 0.0
        %597 = vmatprep.subr.mxu0 0.0
        %598 = vmatpush2.msra.mxu0 0.0
        %599 = vmatprep.subr.mxu0 0.0
        %600 = vmatpush2.msra.mxu0 0.0
        %601 = vmatprep.subr.mxu0 0.0
        %602 = vmatpush2.msra.mxu0 0.0
        %603 = vmatprep.subr.mxu0 0.0
        %604 = vmatpush2.msra.mxu0 0.0
        %605 = vmatprep.subr.mxu0 0.0
        %606 = vmatpush2.msra.mxu0 0.0
        %607 = vmatprep.subr.mxu0 0.0
        %608 = vmatpush2.msra.mxu0 0.0
        %609 = vmatprep.subr.mxu0 0.0
        %610 = vmatpush2.msra.mxu0 0.0
        %611 = vmatprep.subr.mxu0 0.0
        %612 = vmatpush2.msra.mxu0 0.0
        %613 = vmatprep.subr.mxu0 0.0
        %614 = vmatpush2.msra.mxu0 0.0
        %615 = vmatprep.subr.mxu0 0.0
        %616 = vmatpush2.msra.mxu0 0.0
        %617 = vmatprep.subr.mxu0 0.0
        %618 = vmatpush2.msra.mxu0 0.0
        %619 = vmatprep.subr.mxu0 0.0
        %620 = vmatpush2.msra.mxu0 0.0
        %621 = vmatprep.mubr.f32.mxu0 0.0
        %622 = vmatmul.mubr.f32.gmra.mxu0 %v524
        %v623 = vpop.f32.mrf.mxu0
        %v624 = vadd.f32 0.0, %v623
        %v625 = vpop.f32.mrf.mxu0
        %626 = vmatprep.mubr.f32.mxu0 0.0
        %627 = vmatmul.mubr.f32.gmra.mxu0 %v525
        %v628 = vpop.f32.mrf.mxu0
        %v629 = vadd.f32 0.0, %v628
        %v630 = vpop.f32.mrf.mxu0
        %631 = vmatprep.mubr.f32.mxu0 0.0
        %632 = vmatmul.mubr.f32.gmra.mxu0 %v526
        %v633 = vpop.f32.mrf.mxu0
        %v634 = vadd.f32 0.0, %v633
        %v635 = vpop.f32.mrf.mxu0
        %636 = vmatprep.mubr.f32.mxu0 0.0
        %637 = vmatmul.mubr.f32.gmra.mxu0 %v527
        %v638 = vpop.f32.mrf.mxu0
        %v639 = vadd.f32 0.0, %v638
        %v640 = vpop.f32.mrf.mxu0
        %641 = vmatprep.mubr.f32.mxu0 0.0
        %642 = vmatmul.mubr.f32.gmra.mxu0 %v528
        %v643 = vpop.f32.mrf.mxu0
        %v644 = vadd.f32 0.0, %v643
        %v645 = vpop.f32.mrf.mxu0
        %646 = vmatprep.mubr.f32.mxu0 0.0
        %647 = vmatmul.mubr.f32.gmra.mxu0 %v529
        %v648 = vpop.f32.mrf.mxu0
        %v649 = vadd.f32 0.0, %v648
        %v650 = vpop.f32.mrf.mxu0
        %651 = vmatprep.mubr.f32.mxu0 0.0
        %652 = vmatmul.mubr.f32.gmra.mxu0 %v530
        %v653 = vpop.f32.mrf.mxu0
        %v654 = vadd.f32 0.0, %v653
        %v655 = vpop.f32.mrf.mxu0
        %656 = vmatprep.mubr.f32.mxu0 0.0
        %657 = vmatmul.mubr.f32.gmra.mxu0 %v531
        %v658 = vpop.f32.mrf.mxu0
        %v659 = vadd.f32 0.0, %v658
        %v660 = vpop.f32.mrf.mxu0
        %661 = vmatprep.mubr.f32.mxu0 0.0
        %662 = vmatmul.mubr.f32.gmra.mxu0 %v532
        %v663 = vpop.f32.mrf.mxu0
        %v664 = vadd.f32 0.0, %v663
        %v665 = vpop.f32.mrf.mxu0
        %666 = vmatprep.mubr.f32.mxu0 0.0
        %667 = vmatmul.mubr.f32.gmra.mxu0 %v533
        %v668 = vpop.f32.mrf.mxu0
        %v669 = vadd.f32 0.0, %v668
        %v670 = vpop.f32.mrf.mxu0
        %671 = vmatprep.mubr.f32.mxu0 0.0
        %672 = vmatmul.mubr.f32.gmra.mxu0 %v534
        %v673 = vpop.f32.mrf.mxu0
        %v674 = vadd.f32 0.0, %v673
        %v675 = vpop.f32.mrf.mxu0
        %676 = vmatprep.mubr.f32.mxu0 0.0
        %677 = vmatmul.mubr.f32.gmra.mxu0 %v535
        %v678 = vpop.f32.mrf.mxu0
        %v679 = vadd.f32 0.0, %v678
        %v680 = vpop.f32.mrf.mxu0
        %681 = vmatprep.mubr.f32.mxu0 0.0
        %682 = vmatmul.mubr.f32.gmra.mxu0 %v536
        %v683 = vpop.f32.mrf.mxu0
        %v684 = vadd.f32 0.0, %v683
        %v685 = vpop.f32.mrf.mxu0
        %686 = vmatprep.mubr.f32.mxu0 0.0
        %687 = vmatmul.mubr.f32.gmra.mxu0 %v537
        %v688 = vpop.f32.mrf.mxu0
        %v689 = vadd.f32 0.0, %v688
        %v690 = vpop.f32.mrf.mxu0
        %691 = vmatprep.mubr.f32.mxu0 0.0
        %692 = vmatmul.mubr.f32.gmra.mxu0 %v538
        %v693 = vpop.f32.mrf.mxu0
        %v694 = vadd.f32 0.0, %v693
        %v695 = vpop.f32.mrf.mxu0
        %696 = vmatprep.mubr.f32.mxu0 0.0
        %697 = vmatmul.mubr.f32.gmra.mxu0 %v539
        %v698 = vpop.f32.mrf.mxu0
        %v699 = vadd.f32 0.0, %v698
        %v700 = vpop.f32.mrf.mxu0
        %701 = vdwg.mxu0
        %v702 = vpack.c.bf16 %v629, %v624
        %v703 = vpack.c.bf16 %v639, %v634
        %v704 = vpack.c.bf16 %v649, %v644
        %v705 = vpack.c.bf16 %v659, %v654
        %v706 = vpack.c.bf16 %v669, %v664
        %v707 = vpack.c.bf16 %v679, %v674
        %v708 = vpack.c.bf16 %v689, %v684
        %v709 = vpack.c.bf16 %v699, %v694
        %v726 = vunpack.c.l.b16 %v540
        %v727 = vunpack.c.l.b16 %v541
        %v728 = vunpack.c.l.b16 %v542
        %v729 = vunpack.c.l.b16 %v543
        %v730 = vunpack.c.l.b16 %v544
        %v731 = vunpack.c.l.b16 %v545
        %v732 = vunpack.c.l.b16 %v546
        %v733 = vunpack.c.l.b16 %v547
        %v734 = vunpack.c.l.b16 %v548
        %v735 = vunpack.c.l.b16 %v549
        %v736 = vunpack.c.l.b16 %v550
        %v737 = vunpack.c.l.b16 %v551
        %v738 = vunpack.c.l.b16 %v552
        %v739 = vunpack.c.l.b16 %v553
        %v740 = vunpack.c.l.b16 %v554
        %v741 = vunpack.c.l.b16 %v555
        %v742 = vpack.c.b16 %v727, %v726
        %v743 = vpack.c.b16 %v729, %v728
        %v744 = vpack.c.b16 %v731, %v730
        %v745 = vpack.c.b16 %v733, %v732
        %v746 = vpack.c.b16 %v735, %v734
        %v747 = vpack.c.b16 %v737, %v736
        %v748 = vpack.c.b16 %v739, %v738
        %v749 = vpack.c.b16 %v741, %v740
        %758 = vmatprep.subr.bf16.mxu0 0
        %759 = vmatpush1.bf16.xpose.msra.mxu0 %v749
        %760 = vmatprep.subr.bf16.mxu0 0
        %761 = vmatpush1.bf16.xpose.msra.mxu0 %v748
        %762 = vmatprep.subr.bf16.mxu0 0
        %763 = vmatpush1.bf16.xpose.msra.mxu0 %v747
        %764 = vmatprep.subr.bf16.mxu0 0
        %765 = vmatpush1.bf16.xpose.msra.mxu0 %v746
        %766 = vmatprep.subr.bf16.mxu0 0
        %767 = vmatpush1.bf16.xpose.msra.mxu0 %v745
        %768 = vmatprep.subr.bf16.mxu0 0
        %769 = vmatpush1.bf16.xpose.msra.mxu0 %v744
        %770 = vmatprep.subr.bf16.mxu0 0
        %771 = vmatpush1.bf16.xpose.msra.mxu0 %v743
        %772 = vmatprep.subr.bf16.mxu0 0
        %773 = vmatpush1.bf16.xpose.msra.mxu0 %v742
        %774 = vmatprep.subr.bf16.mxu0 0
        %775 = vmatpush2.bf16.xpose.msra.mxu0 0
        %776 = vmatprep.subr.bf16.mxu0 0
        %777 = vmatpush2.bf16.xpose.msra.mxu0 0
        %778 = vmatprep.subr.bf16.mxu0 0
        %779 = vmatpush2.bf16.xpose.msra.mxu0 0
        %780 = vmatprep.subr.bf16.mxu0 0
        %781 = vmatpush2.bf16.xpose.msra.mxu0 0
        %782 = vmatprep.subr.bf16.mxu0 0
        %783 = vmatpush2.bf16.xpose.msra.mxu0 0
        %784 = vmatprep.subr.bf16.mxu0 0
        %785 = vmatpush2.bf16.xpose.msra.mxu0 0
        %786 = vmatprep.subr.bf16.mxu0 0
        %787 = vmatpush2.bf16.xpose.msra.mxu0 0
        %788 = vmatprep.subr.bf16.mxu0 0
        %789 = vmatpush2.bf16.xpose.msra.mxu0 0
        %790 = vmatprep.mubr.bf16.mxu0 0
        %791 = vmatmul.mubr.bf16.gmra.mxu0 %v702
        %v792 = vpop.f32.mrf.mxu0
        %v793 = vadd.f32 0.0, %v792
        %v794 = vpop.f32.mrf.mxu0
        %v795 = vpop.f32.mrf.mxu0
        %v796 = vadd.f32 0.0, %v795
        %v797 = vpop.f32.mrf.mxu0
        %798 = vmatprep.mubr.bf16.mxu0 0
        %799 = vmatmul.mubr.bf16.gmra.mxu0 %v703
        %v800 = vpop.f32.mrf.mxu0
        %v801 = vadd.f32 0.0, %v800
        %v802 = vpop.f32.mrf.mxu0
        %v803 = vpop.f32.mrf.mxu0
        %v804 = vadd.f32 0.0, %v803
        %v805 = vpop.f32.mrf.mxu0
        %806 = vmatprep.mubr.bf16.mxu0 0
        %807 = vmatmul.mubr.bf16.gmra.mxu0 %v704
        %v808 = vpop.f32.mrf.mxu0
        %v809 = vadd.f32 0.0, %v808
        %v810 = vpop.f32.mrf.mxu0
        %v811 = vpop.f32.mrf.mxu0
        %v812 = vadd.f32 0.0, %v811
        %v813 = vpop.f32.mrf.mxu0
        %814 = vmatprep.mubr.bf16.mxu0 0
        %815 = vmatmul.mubr.bf16.gmra.mxu0 %v705
        %v816 = vpop.f32.mrf.mxu0
        %v817 = vadd.f32 0.0, %v816
        %v818 = vpop.f32.mrf.mxu0
        %v819 = vpop.f32.mrf.mxu0
        %v820 = vadd.f32 0.0, %v819
        %v821 = vpop.f32.mrf.mxu0
        %822 = vmatprep.mubr.bf16.mxu0 0
        %823 = vmatmul.mubr.bf16.gmra.mxu0 %v706
        %v824 = vpop.f32.mrf.mxu0
        %v825 = vadd.f32 0.0, %v824
        %v826 = vpop.f32.mrf.mxu0
        %v827 = vpop.f32.mrf.mxu0
        %v828 = vadd.f32 0.0, %v827
        %v829 = vpop.f32.mrf.mxu0
        %830 = vmatprep.mubr.bf16.mxu0 0
        %831 = vmatmul.mubr.bf16.gmra.mxu0 %v707
        %v832 = vpop.f32.mrf.mxu0
        %v833 = vadd.f32 0.0, %v832
        %v834 = vpop.f32.mrf.mxu0
        %v835 = vpop.f32.mrf.mxu0
        %v836 = vadd.f32 0.0, %v835
        %v837 = vpop.f32.mrf.mxu0
        %838 = vmatprep.mubr.bf16.mxu0 0
        %839 = vmatmul.mubr.bf16.gmra.mxu0 %v708
        %v840 = vpop.f32.mrf.mxu0
        %v841 = vadd.f32 0.0, %v840
        %v842 = vpop.f32.mrf.mxu0
        %v843 = vpop.f32.mrf.mxu0
        %v844 = vadd.f32 0.0, %v843
        %v845 = vpop.f32.mrf.mxu0
        %846 = vmatprep.mubr.bf16.mxu0 0
        %847 = vmatmul.mubr.bf16.gmra.mxu0 %v709
        %v848 = vpop.f32.mrf.mxu0
        %v849 = vadd.f32 0.0, %v848
        %v850 = vpop.f32.mrf.mxu0
        %v851 = vpop.f32.mrf.mxu0
        %v852 = vadd.f32 0.0, %v851
        %v853 = vpop.f32.mrf.mxu0
        %854 = vdwg.mxu0
        %v855 = vmul.f32 %v508, %v793
        %v856 = vmul.f32 %v509, %v796
        %v857 = vmul.f32 %v510, %v801
        %v858 = vmul.f32 %v511, %v804
        %v859 = vmul.f32 %v512, %v809
        %v860 = vmul.f32 %v513, %v812
        %v861 = vmul.f32 %v514, %v817
        %v862 = vmul.f32 %v515, %v820
        %v863 = vmul.f32 %v516, %v825
        %v864 = vmul.f32 %v517, %v828
        %v865 = vmul.f32 %v518, %v833
        %v866 = vmul.f32 %v519, %v836
        %v867 = vmul.f32 %v520, %v841
        %v868 = vmul.f32 %v521, %v844
        %v869 = vmul.f32 %v522, %v849
        %v870 = vmul.f32 %v523, %v852
        %871 = vadd.xlane.f32.xlu0 %v855
        %v872 = vpop.xlane.xlu0 %871
        %873 = vadd.xlane.f32.xlu0 %v856
        %v874 = vpop.xlane.xlu0 %873
        %875 = vadd.xlane.f32.xlu0 %v857
        %v876 = vpop.xlane.xlu0 %875
        %877 = vadd.xlane.f32.xlu0 %v858
        %v878 = vpop.xlane.xlu0 %877
        %879 = vadd.xlane.f32.xlu0 %v859
        %v880 = vpop.xlane.xlu0 %879
        %881 = vadd.xlane.f32.xlu0 %v860
        %v882 = vpop.xlane.xlu0 %881
        %883 = vadd.xlane.f32.xlu0 %v861
        %v884 = vpop.xlane.xlu0 %883
        %885 = vadd.xlane.f32.xlu0 %v862
        %v886 = vpop.xlane.xlu0 %885
        %887 = vadd.xlane.f32.xlu0 %v863
        %v888 = vpop.xlane.xlu0 %887
        %889 = vadd.xlane.f32.xlu0 %v864
        %v890 = vpop.xlane.xlu0 %889
        %891 = vadd.xlane.f32.xlu0 %v865
        %v892 = vpop.xlane.xlu0 %891
        %893 = vadd.xlane.f32.xlu0 %v866
        %v894 = vpop.xlane.xlu0 %893
        %895 = vadd.xlane.f32.xlu0 %v867
        %v896 = vpop.xlane.xlu0 %895
        %897 = vadd.xlane.f32.xlu0 %v868
        %v898 = vpop.xlane.xlu0 %897
        %899 = vadd.xlane.f32.xlu0 %v869
        %v900 = vpop.xlane.xlu0 %899
        %901 = vadd.xlane.f32.xlu0 %v870
        %v902 = vpop.xlane.xlu0 %901
        %v903 = vsub.f32 %v793, %v872
        %v904 = vsub.f32 %v796, %v874
        %v905 = vsub.f32 %v801, %v876
        %v906 = vsub.f32 %v804, %v878
        %v907 = vsub.f32 %v809, %v880
        %v908 = vsub.f32 %v812, %v882
        %v909 = vsub.f32 %v817, %v884
        %v910 = vsub.f32 %v820, %v886
        %v911 = vsub.f32 %v825, %v888
        %v912 = vsub.f32 %v828, %v890
        %v913 = vsub.f32 %v833, %v892
        %v914 = vsub.f32 %v836, %v894
        %v915 = vsub.f32 %v841, %v896
        %v916 = vsub.f32 %v844, %v898
        %v917 = vsub.f32 %v849, %v900
        %v918 = vsub.f32 %v852, %v902
        %v919 = vmul.f32 %v508, %v903
        %v920 = vmul.f32 %v509, %v904
        %v921 = vmul.f32 %v510, %v905
        %v922 = vmul.f32 %v511, %v906
        %v923 = vmul.f32 %v512, %v907
        %v924 = vmul.f32 %v513, %v908
        %v925 = vmul.f32 %v514, %v909
        %v926 = vmul.f32 %v515, %v910
        %v927 = vmul.f32 %v516, %v911
        %v928 = vmul.f32 %v517, %v912
        %v929 = vmul.f32 %v518, %v913
        %v930 = vmul.f32 %v519, %v914
        %v931 = vmul.f32 %v520, %v915
        %v932 = vmul.f32 %v521, %v916
        %v933 = vmul.f32 %v522, %v917
        %v934 = vmul.f32 %v523, %v918
        %v935 = vstv %s556
        %v936 = vmul.f32 %v935, %v919
        %v937 = vmul.f32 %v935, %v920
        %v938 = vmul.f32 %v935, %v921
        %v939 = vmul.f32 %v935, %v922
        %v940 = vmul.f32 %v935, %v923
        %v941 = vmul.f32 %v935, %v924
        %v942 = vmul.f32 %v935, %v925
        %v943 = vmul.f32 %v935, %v926
        %v944 = vmul.f32 %v935, %v927
        %v945 = vmul.f32 %v935, %v928
        %v946 = vmul.f32 %v935, %v929
        %v947 = vmul.f32 %v935, %v930
        %v948 = vmul.f32 %v935, %v931
        %v949 = vmul.f32 %v935, %v932
        %v950 = vmul.f32 %v935, %v933
        %v951 = vmul.f32 %v935, %v934
        %v952 = vadd.f32 %v508, %v936
        %v953 = vadd.f32 %v509, %v937
        %v954 = vadd.f32 %v510, %v938
        %v955 = vadd.f32 %v511, %v939
        %v956 = vadd.f32 %v512, %v940
        %v957 = vadd.f32 %v513, %v941
        %v958 = vadd.f32 %v514, %v942
        %v959 = vadd.f32 %v515, %v943
        %v960 = vadd.f32 %v516, %v944
        %v961 = vadd.f32 %v517, %v945
        %v962 = vadd.f32 %v518, %v946
        %v963 = vadd.f32 %v519, %v947
        %v964 = vadd.f32 %v520, %v948
        %v965 = vadd.f32 %v521, %v949
        %v966 = vadd.f32 %v522, %v950
        %v967 = vadd.f32 %v523, %v951
        %v968 = vmax.f32 %v952, 0.0
        %v969 = vmax.f32 %v953, 0.0
        %v970 = vmax.f32 %v954, 0.0
        %v971 = vmax.f32 %v955, 0.0
        %v972 = vmax.f32 %v956, 0.0
        %v973 = vmax.f32 %v957, 0.0
        %v974 = vmax.f32 %v958, 0.0
        %v975 = vmax.f32 %v959, 0.0
        %v976 = vmax.f32 %v960, 0.0
        %v977 = vmax.f32 %v961, 0.0
        %v978 = vmax.f32 %v962, 0.0
        %v979 = vmax.f32 %v963, 0.0
        %v980 = vmax.f32 %v964, 0.0
        %v981 = vmax.f32 %v965, 0.0
        %v982 = vmax.f32 %v966, 0.0
        %v983 = vmax.f32 %v967, 0.0
        %984 = vst [vmem:[#allocation2] sm:$0xff] %v968
        %985 = vst [vmem:[#allocation2 + $0x8] sm:$0xff] %v969
        %986 = vst [vmem:[#allocation2 + $0x10] sm:$0xff] %v970
        %987 = vst [vmem:[#allocation2 + $0x18] sm:$0xff] %v971
        %988 = vst [vmem:[#allocation2 + $0x20] sm:$0xff] %v972
        %989 = vst [vmem:[#allocation2 + $0x28] sm:$0xff] %v973
        %990 = vst [vmem:[#allocation2 + $0x30] sm:$0xff] %v974
        %991 = vst [vmem:[#allocation2 + $0x38] sm:$0xff] %v975
        %992 = vst [vmem:[#allocation2 + $0x40] sm:$0xff] %v976
        %993 = vst [vmem:[#allocation2 + $0x48] sm:$0xff] %v977
        %994 = vst [vmem:[#allocation2 + $0x50] sm:$0xff] %v978
        %995 = vst [vmem:[#allocation2 + $0x58] sm:$0xff] %v979
        %996 = vst [vmem:[#allocation2 + $0x60] sm:$0xff] %v980
        %997 = vst [vmem:[#allocation2 + $0x68] sm:$0xff] %v981
        %998 = vst [vmem:[#allocation2 + $0x70] sm:$0xff] %v982
        %999 = vst [vmem:[#allocation2 + $0x78] sm:$0xff] %v983
        %p1000 = scmp.eq.s32.totalorder %s35, 2
        // Predicated region
        $region57: #{tpu_custom_call.1} parent=35 // pred_check
          %p1001 = pneg %p1000
        $region58: #{tpu_custom_call.1} parent=35 // pred_check_branch
          %1003 = sbr.rel (%p1001) target = $region60
        $region59: #{tpu_custom_call.1} parent=35 // pred_region
          %v1004 = vld [vmem:[#allocation2] sm:$0xff]
          %v1005 = vld [vmem:[#allocation2 + $0x8] sm:$0xff]
          %v1006 = vld [vmem:[#allocation2 + $0x10] sm:$0xff]
          %v1007 = vld [vmem:[#allocation2 + $0x18] sm:$0xff]
          %v1008 = vld [vmem:[#allocation2 + $0x20] sm:$0xff]
          %v1009 = vld [vmem:[#allocation2 + $0x28] sm:$0xff]
          %v1010 = vld [vmem:[#allocation2 + $0x30] sm:$0xff]
          %v1011 = vld [vmem:[#allocation2 + $0x38] sm:$0xff]
          %v1012 = vld [vmem:[#allocation2 + $0x40] sm:$0xff]
          %v1013 = vld [vmem:[#allocation2 + $0x48] sm:$0xff]
          %v1014 = vld [vmem:[#allocation2 + $0x50] sm:$0xff]
          %v1015 = vld [vmem:[#allocation2 + $0x58] sm:$0xff]
          %v1016 = vld [vmem:[#allocation2 + $0x60] sm:$0xff]
          %v1017 = vld [vmem:[#allocation2 + $0x68] sm:$0xff]
          %v1018 = vld [vmem:[#allocation2 + $0x70] sm:$0xff]
          %v1019 = vld [vmem:[#allocation2 + $0x78] sm:$0xff]
          %v1020 = vpack.c.bf16 %v1005, %v1004
          %v1021 = vpack.c.bf16 %v1007, %v1006
          %v1022 = vpack.c.bf16 %v1009, %v1008
          %v1023 = vpack.c.bf16 %v1011, %v1010
          %v1024 = vpack.c.bf16 %v1013, %v1012
          %v1025 = vpack.c.bf16 %v1015, %v1014
          %v1026 = vpack.c.bf16 %v1017, %v1016
          %v1027 = vpack.c.bf16 %v1019, %v1018
          %v1028 = vld [vmem:[#allocation11] sm:$0xf]
          %v1029 = vld [vmem:[#allocation11 + $0x4] sm:$0xf]
          %v1030 = vld [vmem:[#allocation11 + $0x8] sm:$0xf]
          %v1031 = vld [vmem:[#allocation11 + $0xc] sm:$0xf]
          %v1032 = vld [vmem:[#allocation11 + $0x10] sm:$0xf]
          %v1033 = vld [vmem:[#allocation11 + $0x14] sm:$0xf]
          %v1034 = vld [vmem:[#allocation11 + $0x18] sm:$0xf]
          %v1035 = vld [vmem:[#allocation11 + $0x1c] sm:$0xf]
          %v1036 = vld [vmem:[#allocation11 + $0x20] sm:$0xf]
          %v1037 = vld [vmem:[#allocation11 + $0x24] sm:$0xf]
          %v1038 = vld [vmem:[#allocation11 + $0x28] sm:$0xf]
          %v1039 = vld [vmem:[#allocation11 + $0x2c] sm:$0xf]
          %v1040 = vld [vmem:[#allocation11 + $0x30] sm:$0xf]
          %v1041 = vld [vmem:[#allocation11 + $0x34] sm:$0xf]
          %v1042 = vld [vmem:[#allocation11 + $0x38] sm:$0xf]
          %v1043 = vld [vmem:[#allocation11 + $0x3c] sm:$0xf]
          %v1060 = vunpack.c.l.b16 %v1028
          %v1061 = vunpack.c.l.b16 %v1029
          %v1062 = vunpack.c.l.b16 %v1030
          %v1063 = vunpack.c.l.b16 %v1031
          %v1064 = vunpack.c.l.b16 %v1032
          %v1065 = vunpack.c.l.b16 %v1033
          %v1066 = vunpack.c.l.b16 %v1034
          %v1067 = vunpack.c.l.b16 %v1035
          %v1068 = vunpack.c.l.b16 %v1036
          %v1069 = vunpack.c.l.b16 %v1037
          %v1070 = vunpack.c.l.b16 %v1038
          %v1071 = vunpack.c.l.b16 %v1039
          %v1072 = vunpack.c.l.b16 %v1040
          %v1073 = vunpack.c.l.b16 %v1041
          %v1074 = vunpack.c.l.b16 %v1042
          %v1075 = vunpack.c.l.b16 %v1043
          %v1076 = vpack.c.b16 %v1061, %v1060
          %v1077 = vpack.c.b16 %v1063, %v1062
          %v1078 = vpack.c.b16 %v1065, %v1064
          %v1079 = vpack.c.b16 %v1067, %v1066
          %v1080 = vpack.c.b16 %v1069, %v1068
          %v1081 = vpack.c.b16 %v1071, %v1070
          %v1082 = vpack.c.b16 %v1073, %v1072
          %v1083 = vpack.c.b16 %v1075, %v1074
          %1092 = vmatprep.subr.bf16.mxu0 0
          %1093 = vmatpush1.bf16.xpose.msra.mxu0 %v1083
          %1094 = vmatprep.subr.bf16.mxu0 0
          %1095 = vmatpush1.bf16.xpose.msra.mxu0 %v1082
          %1096 = vmatprep.subr.bf16.mxu0 0
          %1097 = vmatpush1.bf16.xpose.msra.mxu0 %v1081
          %1098 = vmatprep.subr.bf16.mxu0 0
          %1099 = vmatpush1.bf16.xpose.msra.mxu0 %v1080
          %1100 = vmatprep.subr.bf16.mxu0 0
          %1101 = vmatpush1.bf16.xpose.msra.mxu0 %v1079
          %1102 = vmatprep.subr.bf16.mxu0 0
          %1103 = vmatpush1.bf16.xpose.msra.mxu0 %v1078
          %1104 = vmatprep.subr.bf16.mxu0 0
          %1105 = vmatpush1.bf16.xpose.msra.mxu0 %v1077
          %1106 = vmatprep.subr.bf16.mxu0 0
          %1107 = vmatpush1.bf16.xpose.msra.mxu0 %v1076
          %1108 = vmatprep.subr.bf16.mxu0 0
          %1109 = vmatpush2.bf16.xpose.msra.mxu0 0
          %1110 = vmatprep.subr.bf16.mxu0 0
          %1111 = vmatpush2.bf16.xpose.msra.mxu0 0
          %1112 = vmatprep.subr.bf16.mxu0 0
          %1113 = vmatpush2.bf16.xpose.msra.mxu0 0
          %1114 = vmatprep.subr.bf16.mxu0 0
          %1115 = vmatpush2.bf16.xpose.msra.mxu0 0
          %1116 = vmatprep.subr.bf16.mxu0 0
          %1117 = vmatpush2.bf16.xpose.msra.mxu0 0
          %1118 = vmatprep.subr.bf16.mxu0 0
          %1119 = vmatpush2.bf16.xpose.msra.mxu0 0
          %1120 = vmatprep.subr.bf16.mxu0 0
          %1121 = vmatpush2.bf16.xpose.msra.mxu0 0
          %1122 = vmatprep.subr.bf16.mxu0 0
          %1123 = vmatpush2.bf16.xpose.msra.mxu0 0
          %1124 = vmatprep.mubr.bf16.mxu0 0
          %1125 = vmatmul.mubr.bf16.gmra.mxu0 %v1020
          %v1126 = vpop.f32.mrf.mxu0
          %v1127 = vadd.f32 0.0, %v1126
          %v1128 = vpop.f32.mrf.mxu0
          %v1129 = vpop.f32.mrf.mxu0
          %v1130 = vadd.f32 0.0, %v1129
          %v1131 = vpop.f32.mrf.mxu0
          %1132 = vmatprep.mubr.bf16.mxu0 0
          %1133 = vmatmul.mubr.bf16.gmra.mxu0 %v1021
          %v1134 = vpop.f32.mrf.mxu0
          %v1135 = vadd.f32 0.0, %v1134
          %v1136 = vpop.f32.mrf.mxu0
          %v1137 = vpop.f32.mrf.mxu0
          %v1138 = vadd.f32 0.0, %v1137
          %v1139 = vpop.f32.mrf.mxu0
          %1140 = vmatprep.mubr.bf16.mxu0 0
          %1141 = vmatmul.mubr.bf16.gmra.mxu0 %v1022
          %v1142 = vpop.f32.mrf.mxu0
          %v1143 = vadd.f32 0.0, %v1142
          %v1144 = vpop.f32.mrf.mxu0
          %v1145 = vpop.f32.mrf.mxu0
          %v1146 = vadd.f32 0.0, %v1145
          %v1147 = vpop.f32.mrf.mxu0
          %1148 = vmatprep.mubr.bf16.mxu0 0
          %1149 = vmatmul.mubr.bf16.gmra.mxu0 %v1023
          %v1150 = vpop.f32.mrf.mxu0
          %v1151 = vadd.f32 0.0, %v1150
          %v1152 = vpop.f32.mrf.mxu0
          %v1153 = vpop.f32.mrf.mxu0
          %v1154 = vadd.f32 0.0, %v1153
          %v1155 = vpop.f32.mrf.mxu0
          %1156 = vmatprep.mubr.bf16.mxu0 0
          %1157 = vmatmul.mubr.bf16.gmra.mxu0 %v1024
          %v1158 = vpop.f32.mrf.mxu0
          %v1159 = vadd.f32 0.0, %v1158
          %v1160 = vpop.f32.mrf.mxu0
          %v1161 = vpop.f32.mrf.mxu0
          %v1162 = vadd.f32 0.0, %v1161
          %v1163 = vpop.f32.mrf.mxu0
          %1164 = vmatprep.mubr.bf16.mxu0 0
          %1165 = vmatmul.mubr.bf16.gmra.mxu0 %v1025
          %v1166 = vpop.f32.mrf.mxu0
          %v1167 = vadd.f32 0.0, %v1166
          %v1168 = vpop.f32.mrf.mxu0
          %v1169 = vpop.f32.mrf.mxu0
          %v1170 = vadd.f32 0.0, %v1169
          %v1171 = vpop.f32.mrf.mxu0
          %1172 = vmatprep.mubr.bf16.mxu0 0
          %1173 = vmatmul.mubr.bf16.gmra.mxu0 %v1026
          %v1174 = vpop.f32.mrf.mxu0
          %v1175 = vadd.f32 0.0, %v1174
          %v1176 = vpop.f32.mrf.mxu0
          %v1177 = vpop.f32.mrf.mxu0
          %v1178 = vadd.f32 0.0, %v1177
          %v1179 = vpop.f32.mrf.mxu0
          %1180 = vmatprep.mubr.bf16.mxu0 0
          %1181 = vmatmul.mubr.bf16.gmra.mxu0 %v1027
          %v1182 = vpop.f32.mrf.mxu0
          %v1183 = vadd.f32 0.0, %v1182
          %v1184 = vpop.f32.mrf.mxu0
          %v1185 = vpop.f32.mrf.mxu0
          %v1186 = vadd.f32 0.0, %v1185
          %v1187 = vpop.f32.mrf.mxu0
          %1188 = vdwg.mxu0
          %1189 = vst [vmem:[%s324] sm:$0xff] %v1127
          %1190 = vst [vmem:[%s324 + $0x8] sm:$0xff] %v1130
          %1191 = vst [vmem:[%s324 + $0x10] sm:$0xff] %v1135
          %1192 = vst [vmem:[%s324 + $0x18] sm:$0xff] %v1138
          %1193 = vst [vmem:[%s324 + $0x20] sm:$0xff] %v1143
          %1194 = vst [vmem:[%s324 + $0x28] sm:$0xff] %v1146
          %1195 = vst [vmem:[%s324 + $0x30] sm:$0xff] %v1151
          %1196 = vst [vmem:[%s324 + $0x38] sm:$0xff] %v1154
          %1197 = vst [vmem:[%s324 + $0x40] sm:$0xff] %v1159
          %1198 = vst [vmem:[%s324 + $0x48] sm:$0xff] %v1162
          %1199 = vst [vmem:[%s324 + $0x50] sm:$0xff] %v1167
          %1200 = vst [vmem:[%s324 + $0x58] sm:$0xff] %v1170
          %1201 = vst [vmem:[%s324 + $0x60] sm:$0xff] %v1175
          %1202 = vst [vmem:[%s324 + $0x68] sm:$0xff] %v1178
          %1203 = vst [vmem:[%s324 + $0x70] sm:$0xff] %v1183
          %1204 = vst [vmem:[%s324 + $0x78] sm:$0xff] %v1186
        $region60: #{tpu_custom_call.1} parent=35 // pred_fallthru
          _
        %s1205 = sand.u32 %s149, 1
        %s1206 = scalar_lea.sflag [#allocation7], %s1205
        %s1207 = sand.u32 %s149, 1
        %s1208 = smul.addr %s1207, 128
        %s1209 = scalar_lea.vmem [#allocation13], %s1208
        // Predicated region
        $region61: #{tpu_custom_call.1} parent=35 // pred_check
          %p1210 = pneg %p159
        $region62: #{tpu_custom_call.1} parent=35 // pred_check_branch
          %1212 = sbr.rel (%p1210) target = $region64
        $region63: #{tpu_custom_call.1} parent=35 // pred_region
          %s1213 = smul.u32 16, %s34
          %s1215 = ssub.s32 2048, 2048
          %1216 = vsyncadd %s1206, %s1215
          %s1217 = smul.addr %s1213, 128
          %s1218 = scalar_lea.hbm %s5, %s1217
          %s1219 = sshll.u32 %s1209, 4
          %s1220 = int_to_ptr.vmem [resolvable:$true] %s1219
          %1225 = dma.vmem_to_hbm [thread:$0]  %s1220, 2048, %s1218, %s1206, 128, 128, 8
        $region64: #{tpu_custom_call.1} parent=35 // pred_fallthru
          _
      $region36: #{tpu_custom_call.1} parent=5 // pred_fallthru
        _
      %p1226 = scmp.le.s32.totalorder 2, %s25
      // Predicated region
      $region65: #{tpu_custom_call.1} parent=5 // pred_check
        %p1227 = pneg %p1226
      $region66: #{tpu_custom_call.1} parent=5 // pred_check_branch
        %1229 = sbr.rel (%p1227) target = $region68
      $region67: #{tpu_custom_call.1} parent=5 // pred_region
        %s1230 = ssub.s32 %s25, 2
        // Predicated region
        $region69: #{tpu_custom_call.1} parent=67 // pred_check
          %p1231 = pneg %p165
        $region70: #{tpu_custom_call.1} parent=67 // pred_check_branch
          %1233 = sbr.rel (%p1231) target = $region72
        $region71: #{tpu_custom_call.1} parent=67 // pred_region
          %s1234 = sand.u32 %s150, 1
          %s1235 = scalar_lea.sflag [#allocation7], %s1234
          %s1236 = sand.u32 %s150, 1
          %s1237 = smul.addr %s1236, 128
          %s1238 = scalar_lea.vmem [#allocation13], %s1237
          %1239 = dma.done %s1235, 2048
        $region72: #{tpu_custom_call.1} parent=67 // pred_fallthru
          _
      $region68: #{tpu_custom_call.1} parent=5 // pred_fallthru
        _
    $region6: #{tpu_custom_call.1} parent=1 // loop_footer
      %s29 = sadd.s32 1, %s25
    $region7: #{tpu_custom_call.1} parent=1 // loop_footer_branch
      %24 = sbr.rel target = $region3
    $region8: #{tpu_custom_call.1} parent=1 // loop_exit
      _
    %1240 = vsyncpa [#allocation6], 1
    %s1241 = scalar_lea.sflag [#allocation6], 1
    %1242 = vsyncpa %s1241, 1
    %1243 = vsyncpa [#allocation9], 1
    %s1244 = scalar_lea.sflag [#allocation9], 1
    %1245 = vsyncpa %s1244, 1
    %1246 = vsyncpa [#allocation12], 1
    %1247 = vsyncpa [#allocation7], 1
    %s1248 = scalar_lea.sflag [#allocation7], 1
    %1249 = vsyncpa %s1248, 1

</llo_original>
